<compile_context>
chip_gen: v7x
topology: tpu7x:2x2x1
jax: 0.10.0
libtpu: 0.0.40
codegen_flags: <defaults>
</compile_context>

<pallas_src>
import jax
import jax.numpy as jnp
from jax.experimental import pallas as pl
from jax.experimental.pallas import tpu as pltpu

LANES = 128          # padded feature width (vreg lane dim)
BATCH_PAD = 8        # padded batch (vreg sublane dim)
BIAS_ROW = 127       # row of each packed weight tile holding the bias
LAYER_DIMS = [(8, 16), (16, 32), (32, 64), (64, 8)]
IN_FEATURES = LAYER_DIMS[0][0]
OUT_FEATURES = LAYER_DIMS[-1][1]


def mlp_kernel(x_ref, w_ref, o_ref, act_ref):
    # x_ref:   (B, 8)        raw, unpadded input (whole array in VMEM, B <= 8)
    # w_ref:   (4, 128, 128) packed [W_i ; b_i in row 127 ; carry-1 at (127,127)]
    # o_ref:   (8, 128)      lane-dense output tile (unmasked stores)
    # act_ref: (8, 128)      VMEM scratch: padded activation tile
    b, f = x_ref.shape

    # In-kernel padding: one full-tile store (zeros + bias lane) then drop x
    # into the top-left corner.  Lane 127 == 1.0 feeds the bias rows of the
    # packed weight tiles; ReLU(1) == 1 keeps it alive across layers.
    lane = jax.lax.broadcasted_iota(jnp.int32, (BATCH_PAD, LANES), 1)
    act_ref[...] = jnp.where(lane == BIAS_ROW, jnp.float32(1.0), jnp.float32(0.0))
    act_ref[0:b, 0:f] = x_ref[...]

    h = act_ref[...]
    # Layer 1: Linear(8,16) + ReLU   (bias folded into the matmul via lane 127)
    h = jnp.maximum(jnp.dot(h, w_ref[0], preferred_element_type=jnp.float32), 0.0)
    # Layer 2: Linear(16,32) + ReLU
    h = jnp.maximum(jnp.dot(h, w_ref[1], preferred_element_type=jnp.float32), 0.0)
    # Layer 3: Linear(32,64), then the ReLU that opens net4
    h = jnp.maximum(jnp.dot(h, w_ref[2], preferred_element_type=jnp.float32), 0.0)
    # Layer 4: Linear(64,8) (no activation)
    o_ref[...] = jnp.dot(h, w_ref[3], preferred_element_type=jnp.float32)


def pack_params(params):
    """Pack w1..w4 / b1..b4 into a single zero-padded (4,128,128) f32 slab."""
    slab = jnp.zeros((len(LAYER_DIMS), LANES, LANES), jnp.float32)
    for i, (fin, fout) in enumerate(LAYER_DIMS):
        w = params[f"w{i + 1}"]                       # (fin, fout)
        b = params[f"b{i + 1}"].reshape(-1)           # (fout,)
        slab = slab.at[i, :fin, :fout].set(w)
        slab = slab.at[i, BIAS_ROW, :fout].set(b)
        if i < len(LAYER_DIMS) - 1:
            # Propagate the constant-1 "bias lane" (lane 127) to the next layer.
            slab = slab.at[i, BIAS_ROW, BIAS_ROW].set(1.0)
    return slab


def _mlp_pallas(x, w_slab):
    return pl.pallas_call(
        mlp_kernel,
        out_shape=jax.ShapeDtypeStruct((BATCH_PAD, LANES), jnp.float32),
        in_specs=[
            # Whole arrays, presented directly in VMEM (no blocking needed for grid=()).
            pl.BlockSpec(memory_space=pltpu.MemorySpace.VMEM),   # x (4, 8)
            pl.BlockSpec(memory_space=pltpu.MemorySpace.VMEM),   # packed weights (4,128,128)
        ],
        out_specs=pl.BlockSpec(memory_space=pltpu.MemorySpace.VMEM),
        scratch_shapes=[pltpu.VMEM((BATCH_PAD, LANES), jnp.float32)],
    )(x, w_slab)


@jax.jit
def dummy_model_forward(x, w_slab):
    """x: [B, 8] float32 (B <= 8); w_slab: (4, 128, 128) packed weights+biases."""
    out_pad = _mlp_pallas(x, w_slab)
    return out_pad[: x.shape[0], :OUT_FEATURES]


def init_params(key):
    """Deterministic init mirroring nn.Linear default (uniform(+-1/sqrt(fan_in)))."""
    params = {}
    for i, (fan_in, fan_out) in enumerate(LAYER_DIMS, start=1):
        key, kw, kb = jax.random.split(key, 3)
        bound = 1.0 / jnp.sqrt(jnp.float32(fan_in))
        params[f"w{i}"] = jax.random.uniform(
            kw, (fan_in, fan_out), jnp.float32, -bound, bound)
        params[f"b{i}"] = jax.random.uniform(
            kb, (1, fan_out), jnp.float32, -bound, bound)
    return params


def reference_forward(x, params):
    h = jnp.maximum(x @ params["w1"] + params["b1"], 0.0)
    h = jnp.maximum(h @ params["w2"] + params["b2"], 0.0)
    h = h @ params["w3"] + params["b3"]
    h = jnp.maximum(h, 0.0)
    return h @ params["w4"] + params["b4"]


if __name__ == "__main__":
    key = jax.random.PRNGKey(0)
    key, kx = jax.random.split(key)
    # matches TestDummyModel.get_input(): torch.rand(4, 8)
    x = jax.random.uniform(kx, (4, IN_FEATURES), jnp.float32)
    params = init_params(key)
    w_slab = pack_params(params)   # one-time packing, outside the kernel

    out = dummy_model_forward(x, w_slab)
    out = jax.block_until_ready(out)

    ref = reference_forward(x, params)
    assert out.shape == (4, OUT_FEATURES), out.shape
    assert jnp.allclose(out, ref, atol=2e-5, rtol=1e-5), "mismatch vs reference"
    print("KERNEL_OK")
</pallas_src>

<mosaic_0001>
module attributes {stable_mosaic.version = 11 : i64} {
  func.func @mlp_kernel(%arg0: memref<4x8xf32, #tpu.memory_space<vmem>>, %arg1: memref<4x128x128xf32, #tpu.memory_space<vmem>>, %arg2: memref<8x128xf32, #tpu.memory_space<vmem>>, %arg3: memref<8x128xf32, #tpu.memory_space<vmem>>) attributes {dimension_semantics = [], scalar_prefetch = 0 : i64, scratch_operands = 1 : i64, tpu.core_type = #tpu.core_type<tc>} {
    %0 = tpu.iota {dimensions = array<i32: 1>} : vector<8x128xi32>
    %c127_i32 = arith.constant 127 : i32
    %1 = vector.broadcast %c127_i32 : i32 to vector<8x128xi32>
    %2 = arith.cmpi eq, %0, %1 : vector<8x128xi32>
    %cst = arith.constant 1.000000e+00 : f32
    %cst_0 = arith.constant 0.000000e+00 : f32
    %3 = vector.broadcast %cst : f32 to vector<8x128xf32>
    %4 = vector.broadcast %cst_0 : f32 to vector<8x128xf32>
    %5 = arith.select %2, %3, %4 : vector<8x128xi1>, vector<8x128xf32>
    %c0 = arith.constant 0 : index
    %c0_1 = arith.constant 0 : index
    %6 = vector.load %arg3[%c0, %c0_1] : memref<8x128xf32, #tpu.memory_space<vmem>>, vector<8x128xf32>
    tpu.vector_store %arg3[%c0, %c0_1], %5 {strides = array<i32>} : memref<8x128xf32, #tpu.memory_space<vmem>>, vector<8x128xf32>,
    %c0_2 = arith.constant 0 : index
    %c0_3 = arith.constant 0 : index
    %7 = vector.load %arg0[%c0_2, %c0_3] : memref<4x8xf32, #tpu.memory_space<vmem>>, vector<4x8xf32>
    %c0_4 = arith.constant 0 : index
    %c0_5 = arith.constant 0 : index
    %8 = vector.load %arg3[%c0_4, %c0_5] : memref<8x128xf32, #tpu.memory_space<vmem>>, vector<4x8xf32>
    tpu.vector_store %arg3[%c0_4, %c0_5], %7 {strides = array<i32>} : memref<8x128xf32, #tpu.memory_space<vmem>>, vector<4x8xf32>,
    %c0_6 = arith.constant 0 : index
    %c0_7 = arith.constant 0 : index
    %9 = vector.load %arg3[%c0_6, %c0_7] : memref<8x128xf32, #tpu.memory_space<vmem>>, vector<8x128xf32>
    %c0_8 = arith.constant 0 : index
    %c0_9 = arith.constant 0 : index
    %c0_10 = arith.constant 0 : index
    %10 = vector.load %arg1[%c0_8, %c0_9, %c0_10] : memref<4x128x128xf32, #tpu.memory_space<vmem>>, vector<1x128x128xf32>
    %11 = vector.shape_cast %10 : vector<1x128x128xf32> to vector<128x128xf32>
    %cst_11 = arith.constant dense<0.000000e+00> : vector<8x128xf32>
    %12 = tpu.matmul %9, %11, %cst_11 {dimension_numbers = #tpu.dot_dimension_numbers<[1], [0], [0], [1], [0, 0, 1, 1], [], []>} : vector<8x128xf32>, vector<128x128xf32>, vector<8x128xf32> -> vector<8x128xf32>
    %cst_12 = arith.constant 0.000000e+00 : f32
    %13 = vector.broadcast %cst_12 : f32 to vector<8x128xf32>
    %14 = arith.maximumf %12, %13 : vector<8x128xf32>
    %c1 = arith.constant 1 : index
    %c0_13 = arith.constant 0 : index
    %c0_14 = arith.constant 0 : index
    %15 = vector.load %arg1[%c1, %c0_13, %c0_14] : memref<4x128x128xf32, #tpu.memory_space<vmem>>, vector<1x128x128xf32>
    %16 = vector.shape_cast %15 : vector<1x128x128xf32> to vector<128x128xf32>
    %cst_15 = arith.constant dense<0.000000e+00> : vector<8x128xf32>
    %17 = tpu.matmul %14, %16, %cst_15 {dimension_numbers = #tpu.dot_dimension_numbers<[1], [0], [0], [1], [0, 0, 1, 1], [], []>} : vector<8x128xf32>, vector<128x128xf32>, vector<8x128xf32> -> vector<8x128xf32>
    %cst_16 = arith.constant 0.000000e+00 : f32
    %18 = vector.broadcast %cst_16 : f32 to vector<8x128xf32>
    %19 = arith.maximumf %17, %18 : vector<8x128xf32>
    %c2 = arith.constant 2 : index
    %c0_17 = arith.constant 0 : index
    %c0_18 = arith.constant 0 : index
    %20 = vector.load %arg1[%c2, %c0_17, %c0_18] : memref<4x128x128xf32, #tpu.memory_space<vmem>>, vector<1x128x128xf32>
    %21 = vector.shape_cast %20 : vector<1x128x128xf32> to vector<128x128xf32>
    %cst_19 = arith.constant dense<0.000000e+00> : vector<8x128xf32>
    %22 = tpu.matmul %19, %21, %cst_19 {dimension_numbers = #tpu.dot_dimension_numbers<[1], [0], [0], [1], [0, 0, 1, 1], [], []>} : vector<8x128xf32>, vector<128x128xf32>, vector<8x128xf32> -> vector<8x128xf32>
    %cst_20 = arith.constant 0.000000e+00 : f32
    %23 = vector.broadcast %cst_20 : f32 to vector<8x128xf32>
    %24 = arith.maximumf %22, %23 : vector<8x128xf32>
    %c3 = arith.constant 3 : index
    %c0_21 = arith.constant 0 : index
    %c0_22 = arith.constant 0 : index
    %25 = vector.load %arg1[%c3, %c0_21, %c0_22] : memref<4x128x128xf32, #tpu.memory_space<vmem>>, vector<1x128x128xf32>
    %26 = vector.shape_cast %25 : vector<1x128x128xf32> to vector<128x128xf32>
    %cst_23 = arith.constant dense<0.000000e+00> : vector<8x128xf32>
    %27 = tpu.matmul %24, %26, %cst_23 {dimension_numbers = #tpu.dot_dimension_numbers<[1], [0], [0], [1], [0, 0, 1, 1], [], []>} : vector<8x128xf32>, vector<128x128xf32>, vector<8x128xf32> -> vector<8x128xf32>
    %c0_24 = arith.constant 0 : index
    %c0_25 = arith.constant 0 : index
    %28 = vector.load %arg2[%c0_24, %c0_25] : memref<8x128xf32, #tpu.memory_space<vmem>>, vector<8x128xf32>
    tpu.vector_store %arg2[%c0_24, %c0_25], %27 {strides = array<i32>} : memref<8x128xf32, #tpu.memory_space<vmem>>, vector<8x128xf32>,
    return
  }
}

</mosaic_0001>

<llo_original>
// kernel: dummy_model_forward.1
$region0: #{dummy_model_forward.1}
  #allocation0 [shape = 'u32[]', space=smem, size = 0x4, offset = 0x4, fixed_abs, tag = 'smem constant byte address 0x4 - core index']
  #allocation1 [shape = 'u32[144,128]{1,0:T(1,128)}', space=vmem, size = 0x12000, scoped, tag = 'internal scratch']
  #allocation2 [shape = 'f32[8,128]{1,0:T(8,128)}', space=vmem, size = 0x1000, scoped, tag = 'scratch operand']
  %s0 = inlined_call_operand.hbm [shape: f32[4,8], index: 0, kind: input, shape index: {}]
  %s1 = inlined_call_operand.hbm [shape: f32[4,128,128], index: 1, kind: input, shape index: {}]
  %s2 = inlined_call_operand.vmem [shape: f32[8,128], index: 2, kind: output, shape index: {}]
  %s3 = sld [smem:[#allocation0]]
  $region26: #{dummy_model_forward.1} parent=0
    _
  %s5 = ssub.s32 1, %s3
  %s6 = scalar_select 0, %s5, %s3
  $region1: #{dummy_model_forward.1} parent=0
    #allocation3 [shape = 'u8[2048]{0}', space=vmem, size = 0x800, scoped, tag = 'input window, operand 0, single buffered']
    #allocation4 [shape = 's32[1]{0}', space=sflag, size = 0x4, scoped, tag = 'scoped memory for dummy_model_forward.1']
    #allocation5 [shape = 'u8[262144]{0}', space=vmem, size = 0x40000, scoped, tag = 'input window, operand 1, single buffered']
    #allocation6 [shape = 's32[1]{0}', space=sflag, size = 0x4, scoped, tag = 'scoped memory for dummy_model_forward.1']
    %7 = vsyncpa [#allocation4], 0
    %8 = vsyncpa [#allocation6], 0
    // Predicated region
    $region2: #{dummy_model_forward.1} parent=1 // pred_check
      _
    $region3: #{dummy_model_forward.1} parent=1 // pred_check_branch
      %10 = sbr.rel (0) target = $region5
    $region4: #{dummy_model_forward.1} parent=1 // pred_region
      %s12 = ssub.s32 64, 64
      %13 = vsyncadd [#allocation4], %s12
      %s15 = sshll.u32 [#allocation3], 4
      %s16 = int_to_ptr.vmem [resolvable:$true] %s15
      %18 = dma.hbm_to_vmem [thread:$0]  %s0, 64, %s16, [#allocation4]
    $region5: #{dummy_model_forward.1} parent=1 // pred_fallthru
      _
    // Predicated region
    $region6: #{dummy_model_forward.1} parent=1 // pred_check
      _
    $region7: #{dummy_model_forward.1} parent=1 // pred_check_branch
      %20 = sbr.rel (0) target = $region9
    $region8: #{dummy_model_forward.1} parent=1 // pred_region
      %s22 = ssub.s32 8192, 8192
      %23 = vsyncadd [#allocation6], %s22
      %s24 = sshll.u32 [#allocation5], 4
      %s25 = int_to_ptr.vmem [resolvable:$true] %s24
      %30 = dma.hbm_to_vmem [thread:$0]  %s1, 8192, %s25, [#allocation6], 128, 128, 8
    $region9: #{dummy_model_forward.1} parent=1 // pred_fallthru
      _
    // Predicated region
    $region10: #{dummy_model_forward.1} parent=1 // pred_check
      _
    $region11: #{dummy_model_forward.1} parent=1 // pred_check_branch
      %32 = sbr.rel (0) target = $region13
    $region12: #{dummy_model_forward.1} parent=1 // pred_region
      %33 = dma.done [#allocation4], 64
    $region13: #{dummy_model_forward.1} parent=1 // pred_fallthru
      _
    // Predicated region
    $region14: #{dummy_model_forward.1} parent=1 // pred_check
      _
    $region15: #{dummy_model_forward.1} parent=1 // pred_check_branch
      %35 = sbr.rel (0) target = $region17
    $region16: #{dummy_model_forward.1} parent=1 // pred_region
      %36 = dma.done [#allocation6], 8192
    $region17: #{dummy_model_forward.1} parent=1 // pred_fallthru
      _
    %v37 = vlaneseq
    %v38 = vand.u32 %v37, 127
    %vm39 = vcmp.eq.s32.totalorder %v38, 127
    %v40 = vsel %vm39, 1.0, 0.0
    %41 = vst [vmem:[#allocation2] sm:$0xff] %v40
    %v42 = vld [vmem:[#allocation3] sm:$0xf]
    %vm43 = vcmask 60416
    %44 = vst.msk [vmem:[#allocation2] sm:$0xf] %vm43, %v42
    %v45 = vld [vmem:[#allocation2] sm:$0xff]
    %v46 = vld [vmem:[#allocation5] sm:$0xff]
    %v47 = vld [vmem:[#allocation5 + $0x8] sm:$0xff]
    %v48 = vld [vmem:[#allocation5 + $0x10] sm:$0xff]
    %v49 = vld [vmem:[#allocation5 + $0x18] sm:$0xff]
    %v50 = vld [vmem:[#allocation5 + $0x20] sm:$0xff]
    %v51 = vld [vmem:[#allocation5 + $0x28] sm:$0xff]
    %v52 = vld [vmem:[#allocation5 + $0x30] sm:$0xff]
    %v53 = vld [vmem:[#allocation5 + $0x38] sm:$0xff]
    %v54 = vld [vmem:[#allocation5 + $0x40] sm:$0xff]
    %v55 = vld [vmem:[#allocation5 + $0x48] sm:$0xff]
    %v56 = vld [vmem:[#allocation5 + $0x50] sm:$0xff]
    %v57 = vld [vmem:[#allocation5 + $0x58] sm:$0xff]
    %v58 = vld [vmem:[#allocation5 + $0x60] sm:$0xff]
    %v59 = vld [vmem:[#allocation5 + $0x68] sm:$0xff]
    %v60 = vld [vmem:[#allocation5 + $0x70] sm:$0xff]
    %v61 = vld [vmem:[#allocation5 + $0x78] sm:$0xff]
    %62 = vmatprep.subr.mxu0 0.0
    %63 = vmatpush1.msra.mxu0 %v46
    %64 = vmatprep.subr.mxu0 0.0
    %65 = vmatpush1.msra.mxu0 %v47
    %66 = vmatprep.subr.mxu0 0.0
    %67 = vmatpush1.msra.mxu0 %v48
    %68 = vmatprep.subr.mxu0 0.0
    %69 = vmatpush1.msra.mxu0 %v49
    %70 = vmatprep.subr.mxu0 0.0
    %71 = vmatpush1.msra.mxu0 %v50
    %72 = vmatprep.subr.mxu0 0.0
    %73 = vmatpush1.msra.mxu0 %v51
    %74 = vmatprep.subr.mxu0 0.0
    %75 = vmatpush1.msra.mxu0 %v52
    %76 = vmatprep.subr.mxu0 0.0
    %77 = vmatpush1.msra.mxu0 %v53
    %78 = vmatprep.subr.mxu0 0.0
    %79 = vmatpush1.msra.mxu0 %v54
    %80 = vmatprep.subr.mxu0 0.0
    %81 = vmatpush1.msra.mxu0 %v55
    %82 = vmatprep.subr.mxu0 0.0
    %83 = vmatpush1.msra.mxu0 %v56
    %84 = vmatprep.subr.mxu0 0.0
    %85 = vmatpush1.msra.mxu0 %v57
    %86 = vmatprep.subr.mxu0 0.0
    %87 = vmatpush1.msra.mxu0 %v58
    %88 = vmatprep.subr.mxu0 0.0
    %89 = vmatpush1.msra.mxu0 %v59
    %90 = vmatprep.subr.mxu0 0.0
    %91 = vmatpush1.msra.mxu0 %v60
    %92 = vmatprep.subr.mxu0 0.0
    %93 = vmatpush1.msra.mxu0 %v61
    %94 = vmatprep.subr.mxu0 0.0
    %95 = vmatpush1.msra.mxu0 0.0
    %96 = vmatprep.subr.mxu0 0.0
    %97 = vmatpush1.msra.mxu0 0.0
    %98 = vmatprep.subr.mxu0 0.0
    %99 = vmatpush1.msra.mxu0 0.0
    %100 = vmatprep.subr.mxu0 0.0
    %101 = vmatpush1.msra.mxu0 0.0
    %102 = vmatprep.subr.mxu0 0.0
    %103 = vmatpush1.msra.mxu0 0.0
    %104 = vmatprep.subr.mxu0 0.0
    %105 = vmatpush1.msra.mxu0 0.0
    %106 = vmatprep.subr.mxu0 0.0
    %107 = vmatpush1.msra.mxu0 0.0
    %108 = vmatprep.subr.mxu0 0.0
    %109 = vmatpush1.msra.mxu0 0.0
    %110 = vmatprep.subr.mxu0 0.0
    %111 = vmatpush1.msra.mxu0 0.0
    %112 = vmatprep.subr.mxu0 0.0
    %113 = vmatpush1.msra.mxu0 0.0
    %114 = vmatprep.subr.mxu0 0.0
    %115 = vmatpush1.msra.mxu0 0.0
    %116 = vmatprep.subr.mxu0 0.0
    %117 = vmatpush1.msra.mxu0 0.0
    %118 = vmatprep.subr.mxu0 0.0
    %119 = vmatpush1.msra.mxu0 0.0
    %120 = vmatprep.subr.mxu0 0.0
    %121 = vmatpush1.msra.mxu0 0.0
    %122 = vmatprep.subr.mxu0 0.0
    %123 = vmatpush1.msra.mxu0 0.0
    %124 = vmatprep.subr.mxu0 0.0
    %125 = vmatpush1.msra.mxu0 0.0
    %126 = vmatprep.mubr.f32.mxu0 0.0
    %127 = vmatmul.mubr.f32.gmra.mrb[0].mxu0 %v45
    %v128 = vpop.f32.mrb[0].mxu0
    %v129 = vadd.f32 0.0, %v128
    %v130 = vpop.f32.mrb[0].mxu0
    %131 = vdwg.mxu0
    %v132 = vmax.f32 %v129, 0.0
    %s133 = scalar_lea.vmem [#allocation5], 128
    %v134 = vld [vmem:[%s133] sm:$0xff]
    %v135 = vld [vmem:[%s133 + $0x8] sm:$0xff]
    %v136 = vld [vmem:[%s133 + $0x10] sm:$0xff]
    %v137 = vld [vmem:[%s133 + $0x18] sm:$0xff]
    %v138 = vld [vmem:[%s133 + $0x20] sm:$0xff]
    %v139 = vld [vmem:[%s133 + $0x28] sm:$0xff]
    %v140 = vld [vmem:[%s133 + $0x30] sm:$0xff]
    %v141 = vld [vmem:[%s133 + $0x38] sm:$0xff]
    %v142 = vld [vmem:[%s133 + $0x40] sm:$0xff]
    %v143 = vld [vmem:[%s133 + $0x48] sm:$0xff]
    %v144 = vld [vmem:[%s133 + $0x50] sm:$0xff]
    %v145 = vld [vmem:[%s133 + $0x58] sm:$0xff]
    %v146 = vld [vmem:[%s133 + $0x60] sm:$0xff]
    %v147 = vld [vmem:[%s133 + $0x68] sm:$0xff]
    %v148 = vld [vmem:[%s133 + $0x70] sm:$0xff]
    %v149 = vld [vmem:[%s133 + $0x78] sm:$0xff]
    %150 = vmatprep.subr.mxu0 0.0
    %151 = vmatpush1.msra.mxu0 %v134
    %152 = vmatprep.subr.mxu0 0.0
    %153 = vmatpush1.msra.mxu0 %v135
    %154 = vmatprep.subr.mxu0 0.0
    %155 = vmatpush1.msra.mxu0 %v136
    %156 = vmatprep.subr.mxu0 0.0
    %157 = vmatpush1.msra.mxu0 %v137
    %158 = vmatprep.subr.mxu0 0.0
    %159 = vmatpush1.msra.mxu0 %v138
    %160 = vmatprep.subr.mxu0 0.0
    %161 = vmatpush1.msra.mxu0 %v139
    %162 = vmatprep.subr.mxu0 0.0
    %163 = vmatpush1.msra.mxu0 %v140
    %164 = vmatprep.subr.mxu0 0.0
    %165 = vmatpush1.msra.mxu0 %v141
    %166 = vmatprep.subr.mxu0 0.0
    %167 = vmatpush1.msra.mxu0 %v142
    %168 = vmatprep.subr.mxu0 0.0
    %169 = vmatpush1.msra.mxu0 %v143
    %170 = vmatprep.subr.mxu0 0.0
    %171 = vmatpush1.msra.mxu0 %v144
    %172 = vmatprep.subr.mxu0 0.0
    %173 = vmatpush1.msra.mxu0 %v145
    %174 = vmatprep.subr.mxu0 0.0
    %175 = vmatpush1.msra.mxu0 %v146
    %176 = vmatprep.subr.mxu0 0.0
    %177 = vmatpush1.msra.mxu0 %v147
    %178 = vmatprep.subr.mxu0 0.0
    %179 = vmatpush1.msra.mxu0 %v148
    %180 = vmatprep.subr.mxu0 0.0
    %181 = vmatpush1.msra.mxu0 %v149
    %182 = vmatprep.subr.mxu0 0.0
    %183 = vmatpush1.msra.mxu0 0.0
    %184 = vmatprep.subr.mxu0 0.0
    %185 = vmatpush1.msra.mxu0 0.0
    %186 = vmatprep.subr.mxu0 0.0
    %187 = vmatpush1.msra.mxu0 0.0
    %188 = vmatprep.subr.mxu0 0.0
    %189 = vmatpush1.msra.mxu0 0.0
    %190 = vmatprep.subr.mxu0 0.0
    %191 = vmatpush1.msra.mxu0 0.0
    %192 = vmatprep.subr.mxu0 0.0
    %193 = vmatpush1.msra.mxu0 0.0
    %194 = vmatprep.subr.mxu0 0.0
    %195 = vmatpush1.msra.mxu0 0.0
    %196 = vmatprep.subr.mxu0 0.0
    %197 = vmatpush1.msra.mxu0 0.0
    %198 = vmatprep.subr.mxu0 0.0
    %199 = vmatpush1.msra.mxu0 0.0
    %200 = vmatprep.subr.mxu0 0.0
    %201 = vmatpush1.msra.mxu0 0.0
    %202 = vmatprep.subr.mxu0 0.0
    %203 = vmatpush1.msra.mxu0 0.0
    %204 = vmatprep.subr.mxu0 0.0
    %205 = vmatpush1.msra.mxu0 0.0
    %206 = vmatprep.subr.mxu0 0.0
    %207 = vmatpush1.msra.mxu0 0.0
    %208 = vmatprep.subr.mxu0 0.0
    %209 = vmatpush1.msra.mxu0 0.0
    %210 = vmatprep.subr.mxu0 0.0
    %211 = vmatpush1.msra.mxu0 0.0
    %212 = vmatprep.subr.mxu0 0.0
    %213 = vmatpush1.msra.mxu0 0.0
    %214 = vmatprep.mubr.f32.mxu0 0.0
    %215 = vmatmul.mubr.f32.gmra.mrb[0].mxu0 %v132
    %v216 = vpop.f32.mrb[0].mxu0
    %v217 = vadd.f32 0.0, %v216
    %v218 = vpop.f32.mrb[0].mxu0
    %219 = vdwg.mxu0
    %v220 = vmax.f32 %v217, 0.0
    %s221 = scalar_lea.vmem [#allocation5], 256
    %v222 = vld [vmem:[%s221] sm:$0xff]
    %v223 = vld [vmem:[%s221 + $0x8] sm:$0xff]
    %v224 = vld [vmem:[%s221 + $0x10] sm:$0xff]
    %v225 = vld [vmem:[%s221 + $0x18] sm:$0xff]
    %v226 = vld [vmem:[%s221 + $0x20] sm:$0xff]
    %v227 = vld [vmem:[%s221 + $0x28] sm:$0xff]
    %v228 = vld [vmem:[%s221 + $0x30] sm:$0xff]
    %v229 = vld [vmem:[%s221 + $0x38] sm:$0xff]
    %v230 = vld [vmem:[%s221 + $0x40] sm:$0xff]
    %v231 = vld [vmem:[%s221 + $0x48] sm:$0xff]
    %v232 = vld [vmem:[%s221 + $0x50] sm:$0xff]
    %v233 = vld [vmem:[%s221 + $0x58] sm:$0xff]
    %v234 = vld [vmem:[%s221 + $0x60] sm:$0xff]
    %v235 = vld [vmem:[%s221 + $0x68] sm:$0xff]
    %v236 = vld [vmem:[%s221 + $0x70] sm:$0xff]
    %v237 = vld [vmem:[%s221 + $0x78] sm:$0xff]
    %238 = vmatprep.subr.mxu0 0.0
    %239 = vmatpush1.msra.mxu0 %v222
    %240 = vmatprep.subr.mxu0 0.0
    %241 = vmatpush1.msra.mxu0 %v223
    %242 = vmatprep.subr.mxu0 0.0
    %243 = vmatpush1.msra.mxu0 %v224
    %244 = vmatprep.subr.mxu0 0.0
    %245 = vmatpush1.msra.mxu0 %v225
    %246 = vmatprep.subr.mxu0 0.0
    %247 = vmatpush1.msra.mxu0 %v226
    %248 = vmatprep.subr.mxu0 0.0
    %249 = vmatpush1.msra.mxu0 %v227
    %250 = vmatprep.subr.mxu0 0.0
    %251 = vmatpush1.msra.mxu0 %v228
    %252 = vmatprep.subr.mxu0 0.0
    %253 = vmatpush1.msra.mxu0 %v229
    %254 = vmatprep.subr.mxu0 0.0
    %255 = vmatpush1.msra.mxu0 %v230
    %256 = vmatprep.subr.mxu0 0.0
    %257 = vmatpush1.msra.mxu0 %v231
    %258 = vmatprep.subr.mxu0 0.0
    %259 = vmatpush1.msra.mxu0 %v232
    %260 = vmatprep.subr.mxu0 0.0
    %261 = vmatpush1.msra.mxu0 %v233
    %262 = vmatprep.subr.mxu0 0.0
    %263 = vmatpush1.msra.mxu0 %v234
    %264 = vmatprep.subr.mxu0 0.0
    %265 = vmatpush1.msra.mxu0 %v235
    %266 = vmatprep.subr.mxu0 0.0
    %267 = vmatpush1.msra.mxu0 %v236
    %268 = vmatprep.subr.mxu0 0.0
    %269 = vmatpush1.msra.mxu0 %v237
    %270 = vmatprep.subr.mxu0 0.0
    %271 = vmatpush1.msra.mxu0 0.0
    %272 = vmatprep.subr.mxu0 0.0
    %273 = vmatpush1.msra.mxu0 0.0
    %274 = vmatprep.subr.mxu0 0.0
    %275 = vmatpush1.msra.mxu0 0.0
    %276 = vmatprep.subr.mxu0 0.0
    %277 = vmatpush1.msra.mxu0 0.0
    %278 = vmatprep.subr.mxu0 0.0
    %279 = vmatpush1.msra.mxu0 0.0
    %280 = vmatprep.subr.mxu0 0.0
    %281 = vmatpush1.msra.mxu0 0.0
    %282 = vmatprep.subr.mxu0 0.0
    %283 = vmatpush1.msra.mxu0 0.0
    %284 = vmatprep.subr.mxu0 0.0
    %285 = vmatpush1.msra.mxu0 0.0
    %286 = vmatprep.subr.mxu0 0.0
    %287 = vmatpush1.msra.mxu0 0.0
    %288 = vmatprep.subr.mxu0 0.0
    %289 = vmatpush1.msra.mxu0 0.0
    %290 = vmatprep.subr.mxu0 0.0
    %291 = vmatpush1.msra.mxu0 0.0
    %292 = vmatprep.subr.mxu0 0.0
    %293 = vmatpush1.msra.mxu0 0.0
    %294 = vmatprep.subr.mxu0 0.0
    %295 = vmatpush1.msra.mxu0 0.0
    %296 = vmatprep.subr.mxu0 0.0
    %297 = vmatpush1.msra.mxu0 0.0
    %298 = vmatprep.subr.mxu0 0.0
    %299 = vmatpush1.msra.mxu0 0.0
    %300 = vmatprep.subr.mxu0 0.0
    %301 = vmatpush1.msra.mxu0 0.0
    %302 = vmatprep.mubr.f32.mxu0 0.0
    %303 = vmatmul.mubr.f32.gmra.mrb[0].mxu0 %v220
    %v304 = vpop.f32.mrb[0].mxu0
    %v305 = vadd.f32 0.0, %v304
    %v306 = vpop.f32.mrb[0].mxu0
    %307 = vdwg.mxu0
    %v308 = vmax.f32 %v305, 0.0
    %s309 = scalar_lea.vmem [#allocation5], 384
    %v310 = vld [vmem:[%s309] sm:$0xff]
    %v311 = vld [vmem:[%s309 + $0x8] sm:$0xff]
    %v312 = vld [vmem:[%s309 + $0x10] sm:$0xff]
    %v313 = vld [vmem:[%s309 + $0x18] sm:$0xff]
    %v314 = vld [vmem:[%s309 + $0x20] sm:$0xff]
    %v315 = vld [vmem:[%s309 + $0x28] sm:$0xff]
    %v316 = vld [vmem:[%s309 + $0x30] sm:$0xff]
    %v317 = vld [vmem:[%s309 + $0x38] sm:$0xff]
    %v318 = vld [vmem:[%s309 + $0x40] sm:$0xff]
    %v319 = vld [vmem:[%s309 + $0x48] sm:$0xff]
    %v320 = vld [vmem:[%s309 + $0x50] sm:$0xff]
    %v321 = vld [vmem:[%s309 + $0x58] sm:$0xff]
    %v322 = vld [vmem:[%s309 + $0x60] sm:$0xff]
    %v323 = vld [vmem:[%s309 + $0x68] sm:$0xff]
    %v324 = vld [vmem:[%s309 + $0x70] sm:$0xff]
    %v325 = vld [vmem:[%s309 + $0x78] sm:$0xff]
    %326 = vmatprep.subr.mxu0 0.0
    %327 = vmatpush1.msra.mxu0 %v310
    %328 = vmatprep.subr.mxu0 0.0
    %329 = vmatpush1.msra.mxu0 %v311
    %330 = vmatprep.subr.mxu0 0.0
    %331 = vmatpush1.msra.mxu0 %v312
    %332 = vmatprep.subr.mxu0 0.0
    %333 = vmatpush1.msra.mxu0 %v313
    %334 = vmatprep.subr.mxu0 0.0
    %335 = vmatpush1.msra.mxu0 %v314
    %336 = vmatprep.subr.mxu0 0.0
    %337 = vmatpush1.msra.mxu0 %v315
    %338 = vmatprep.subr.mxu0 0.0
    %339 = vmatpush1.msra.mxu0 %v316
    %340 = vmatprep.subr.mxu0 0.0
    %341 = vmatpush1.msra.mxu0 %v317
    %342 = vmatprep.subr.mxu0 0.0
    %343 = vmatpush1.msra.mxu0 %v318
    %344 = vmatprep.subr.mxu0 0.0
    %345 = vmatpush1.msra.mxu0 %v319
    %346 = vmatprep.subr.mxu0 0.0
    %347 = vmatpush1.msra.mxu0 %v320
    %348 = vmatprep.subr.mxu0 0.0
    %349 = vmatpush1.msra.mxu0 %v321
    %350 = vmatprep.subr.mxu0 0.0
    %351 = vmatpush1.msra.mxu0 %v322
    %352 = vmatprep.subr.mxu0 0.0
    %353 = vmatpush1.msra.mxu0 %v323
    %354 = vmatprep.subr.mxu0 0.0
    %355 = vmatpush1.msra.mxu0 %v324
    %356 = vmatprep.subr.mxu0 0.0
    %357 = vmatpush1.msra.mxu0 %v325
    %358 = vmatprep.subr.mxu0 0.0
    %359 = vmatpush1.msra.mxu0 0.0
    %360 = vmatprep.subr.mxu0 0.0
    %361 = vmatpush1.msra.mxu0 0.0
    %362 = vmatprep.subr.mxu0 0.0
    %363 = vmatpush1.msra.mxu0 0.0
    %364 = vmatprep.subr.mxu0 0.0
    %365 = vmatpush1.msra.mxu0 0.0
    %366 = vmatprep.subr.mxu0 0.0
    %367 = vmatpush1.msra.mxu0 0.0
    %368 = vmatprep.subr.mxu0 0.0
    %369 = vmatpush1.msra.mxu0 0.0
    %370 = vmatprep.subr.mxu0 0.0
    %371 = vmatpush1.msra.mxu0 0.0
    %372 = vmatprep.subr.mxu0 0.0
    %373 = vmatpush1.msra.mxu0 0.0
    %374 = vmatprep.subr.mxu0 0.0
    %375 = vmatpush1.msra.mxu0 0.0
    %376 = vmatprep.subr.mxu0 0.0
    %377 = vmatpush1.msra.mxu0 0.0
    %378 = vmatprep.subr.mxu0 0.0
    %379 = vmatpush1.msra.mxu0 0.0
    %380 = vmatprep.subr.mxu0 0.0
    %381 = vmatpush1.msra.mxu0 0.0
    %382 = vmatprep.subr.mxu0 0.0
    %383 = vmatpush1.msra.mxu0 0.0
    %384 = vmatprep.subr.mxu0 0.0
    %385 = vmatpush1.msra.mxu0 0.0
    %386 = vmatprep.subr.mxu0 0.0
    %387 = vmatpush1.msra.mxu0 0.0
    %388 = vmatprep.subr.mxu0 0.0
    %389 = vmatpush1.msra.mxu0 0.0
    %390 = vmatprep.mubr.f32.mxu0 0.0
    %391 = vmatmul.mubr.f32.gmra.mrb[0].mxu0 %v308
    %v392 = vpop.f32.mrb[0].mxu0
    %v393 = vadd.f32 0.0, %v392
    %v394 = vpop.f32.mrb[0].mxu0
    %395 = vdwg.mxu0
    %396 = vst [vmem:[%s2] sm:$0xff] %v393
    // Predicated region
    $region18: #{dummy_model_forward.1} parent=1 // pred_check
      _
    $region19: #{dummy_model_forward.1} parent=1 // pred_check_branch
      %398 = sbr.rel (0) target = $region21
    $region20: #{dummy_model_forward.1} parent=1 // pred_region
      _
    $region21: #{dummy_model_forward.1} parent=1 // pred_fallthru
      _
    // Predicated region
    $region22: #{dummy_model_forward.1} parent=1 // pred_check
      _
    $region23: #{dummy_model_forward.1} parent=1 // pred_check_branch
      %400 = sbr.rel (0) target = $region25
    $region24: #{dummy_model_forward.1} parent=1 // pred_region
      _
    $region25: #{dummy_model_forward.1} parent=1 // pred_fallthru
      _
    %401 = vsyncpa [#allocation4], 1
    %402 = vsyncpa [#allocation6], 1

</llo_original>
